<compile_context>
chip_gen: v7x
topology: tpu7x:2x2x1
jax: 0.10.0
libtpu: 0.0.40
codegen_flags: <defaults>
</compile_context>

<pallas_src>
import functools

import jax
import jax.numpy as jnp
from jax.experimental import pallas as pl
from jax.experimental.pallas import tpu as pltpu


def _round_up(x, m):
    return ((x + m - 1) // m) * m


def _critic_kernel(stt_ref, act_ref,
                   w1_ref, b1_ref,
                   w2_ref, b2_ref,
                   w3_ref, b3_ref,
                   out_ref):
    # Upcast (no-op for f32 inputs; cheap VPU cast for bf16 inputs).
    x = stt_ref[...].astype(jnp.float32) * act_ref[...].astype(jnp.float32)

    # linear1 + ReLU (MXU matmul, f32 accumulate)
    h1 = jnp.maximum(
        jnp.dot(x, w1_ref[...], preferred_element_type=jnp.float32) + b1_ref[...],
        0.0)
    # linear2 + ReLU
    h2 = jnp.maximum(
        jnp.dot(h1, w2_ref[...], preferred_element_type=jnp.float32) + b2_ref[...],
        0.0)
    # linear3 (no activation); N is small (e.g. 4) -> masked store, which is
    # fine because writeback DMA bytes, not the vst slot, matter here.
    out = jnp.dot(h2, w3_ref[...], preferred_element_type=jnp.float32) + b3_ref[...]
    out_ref[...] = out.astype(out_ref.dtype)


def critic_forward(stt, act, params, *, batch_tile=2048, input_dtype=None):
    """Run the Critic forward pass as a batch-tiled Pallas kernel.

    stt, act: [batch, input_size] float32
    params:   dict with w1 (in,hid), b1 (hid,), w2 (hid,hid), b2 (hid,),
              w3 (hid,out), b3 (out,) -- weights stored as (in, out).
    input_dtype: None keeps f32 end-to-end (exact vs reference).
                 jnp.bfloat16 casts stt/act *before* the pallas_call so the
                 dominant input DMA halves; compute stays f32 inside.
    """
    batch, in_size = stt.shape
    hid = params["w1"].shape[1]
    out_size = params["w3"].shape[1]
    SUBLANES = 8

    if input_dtype is not None:
        # Cast at the call boundary so HBM->VMEM DMA bytes actually shrink.
        stt = stt.astype(input_dtype)
        act = act.astype(input_dtype)

    # --- Batch tiling --------------------------------------------------------
    # Big tiles amortize the ~0.35us/step overhead; clamp for small batches.
    tb = _round_up(min(batch_tile, batch), SUBLANES)
    # Ensure >= 2 grid steps for non-trivial batches so v7x megacore
    # ("parallel" axis) can shard work across its two TensorCores.
    if batch > 2 * SUBLANES:
        tb = min(tb, _round_up(pl.cdiv(batch, 2), SUBLANES))
    grid = (pl.cdiv(batch, tb),)  # ragged edge block handled by Pallas masking

    # Biases as (1, features) so they broadcast cleanly over (tb, features).
    b1 = params["b1"].reshape(1, -1)
    b2 = params["b2"].reshape(1, -1)
    b3 = params["b3"].reshape(1, -1)

    in_specs = [
        pl.BlockSpec((tb, in_size), lambda i: (i, 0)),        # stt tile
        pl.BlockSpec((tb, in_size), lambda i: (i, 0)),        # act tile
        pl.BlockSpec((in_size, hid), lambda i: (0, 0)),       # w1 (resident)
        pl.BlockSpec((1, hid), lambda i: (0, 0)),             # b1
        pl.BlockSpec((hid, hid), lambda i: (0, 0)),           # w2
        pl.BlockSpec((1, hid), lambda i: (0, 0)),             # b2
        pl.BlockSpec((hid, out_size), lambda i: (0, 0)),      # w3
        pl.BlockSpec((1, out_size), lambda i: (0, 0)),        # b3
    ]
    out_specs = pl.BlockSpec((tb, out_size), lambda i: (i, 0))

    out = pl.pallas_call(
        _critic_kernel,
        out_shape=jax.ShapeDtypeStruct((batch, out_size), jnp.float32),
        grid=grid,
        in_specs=in_specs,
        out_specs=out_specs,
        compiler_params=pltpu.CompilerParams(
            # Batch tiles are independent -> shard across TCs on v7x megacore.
            dimension_semantics=("parallel",),
        ),
    )(stt, act, params["w1"], b1, params["w2"], b2, params["w3"], b3)

    return out


def init_critic_params(key, input_size, hidden_size, output_size):
    """Deterministic init mimicking PyTorch nn.Linear default (U[-1/sqrt(fan_in), +])."""
    def linear_init(k, fan_in, fan_out):
        kw, kb = jax.random.split(k)
        bound = 1.0 / jnp.sqrt(fan_in)
        # Stored directly as (in, out) -- i.e. transposed relative to PyTorch.
        w = jax.random.uniform(kw, (fan_in, fan_out), jnp.float32, -bound, bound)
        b = jax.random.uniform(kb, (fan_out,), jnp.float32, -bound, bound)
        return w, b

    k1, k2, k3 = jax.random.split(key, 3)
    w1, b1 = linear_init(k1, input_size, hidden_size)
    w2, b2 = linear_init(k2, hidden_size, hidden_size)
    w3, b3 = linear_init(k3, hidden_size, output_size)
    return {"w1": w1, "b1": b1, "w2": w2, "b2": b2, "w3": w3, "b3": b3}


def critic_ref(stt, act, params):
    """Pure-JAX reference for correctness checking (f32 accumulation)."""
    dot = functools.partial(jnp.dot, preferred_element_type=jnp.float32)
    x = stt * act
    x = jax.nn.relu(dot(x, params["w1"]) + params["b1"])
    x = jax.nn.relu(dot(x, params["w2"]) + params["b2"])
    return dot(x, params["w3"]) + params["b3"]


if __name__ == "__main__":
    input_size, hidden_size, output_size = 32, 32, 4

    key = jax.random.PRNGKey(0)
    kp, ks, ka, ks2, ka2, ks3, ka3 = jax.random.split(key, 7)
    params = init_critic_params(kp, input_size, hidden_size, output_size)

    # Case 1: tiny batch (single grid step), exact f32 path.
    batch = 8
    stt = jax.random.normal(ks, (batch, input_size), jnp.float32)
    act = jax.random.normal(ka, (batch, input_size), jnp.float32)
    out = jax.block_until_ready(critic_forward(stt, act, params))
    ref = critic_ref(stt, act, params)
    assert out.shape == (batch, output_size)
    assert jnp.allclose(out, ref, atol=1e-4, rtol=1e-4), \
        "mismatch vs JAX reference (batch=8)"

    # Case 2: ragged batch exercising the masked edge block + multi-step grid.
    batch2 = 37
    stt2 = jax.random.normal(ks2, (batch2, input_size), jnp.float32)
    act2 = jax.random.normal(ka2, (batch2, input_size), jnp.float32)
    out2 = jax.block_until_ready(
        critic_forward(stt2, act2, params, batch_tile=16))
    ref2 = critic_ref(stt2, act2, params)
    assert out2.shape == (batch2, output_size)
    assert jnp.allclose(out2, ref2, atol=1e-4, rtol=1e-4), \
        "mismatch vs JAX reference (batch=37)"

    # Case 3: bf16-at-the-boundary path (halved input DMA); looser tolerance
    # since the inputs are quantized to bf16 before the kernel.
    batch3 = 64
    stt3 = jax.random.normal(ks3, (batch3, input_size), jnp.float32)
    act3 = jax.random.normal(ka3, (batch3, input_size), jnp.float32)
    out3 = jax.block_until_ready(
        critic_forward(stt3, act3, params, input_dtype=jnp.bfloat16))
    ref3 = critic_ref(stt3, act3, params)
    assert out3.shape == (batch3, output_size)
    assert jnp.allclose(out3, ref3, atol=3e-2, rtol=3e-2), \
        "mismatch vs JAX reference (bf16 inputs, batch=64)"

    print("KERNEL_OK")
</pallas_src>

<mosaic_0001>
module attributes {stable_mosaic.version = 11 : i64} {
  func.func @_critic_kernel(%arg0: i32, %arg1: memref<8x32xf32, #tpu.memory_space<vmem>>, %arg2: memref<8x32xf32, #tpu.memory_space<vmem>>, %arg3: memref<32x32xf32, #tpu.memory_space<vmem>>, %arg4: memref<1x32xf32, #tpu.memory_space<vmem>>, %arg5: memref<32x32xf32, #tpu.memory_space<vmem>>, %arg6: memref<1x32xf32, #tpu.memory_space<vmem>>, %arg7: memref<32x4xf32, #tpu.memory_space<vmem>>, %arg8: memref<1x4xf32, #tpu.memory_space<vmem>>, %arg9: memref<8x4xf32, #tpu.memory_space<vmem>>) attributes {dimension_semantics = [#tpu.dimension_semantics<parallel>], iteration_bounds = array<i64: 1>, scalar_prefetch = 0 : i64, scratch_operands = 0 : i64, tpu.core_type = #tpu.core_type<tc>, window_params = [{transform_indices = @transform_0, window_bounds = array<i64: 8, 32>}, {transform_indices = @transform_1, window_bounds = array<i64: 8, 32>}, {pipeline_mode = #tpu.pipeline_mode<synchronous>, transform_indices = @transform_2, window_bounds = array<i64: 32, 32>}, {pipeline_mode = #tpu.pipeline_mode<synchronous>, transform_indices = @transform_3, window_bounds = array<i64: 1, 32>}, {pipeline_mode = #tpu.pipeline_mode<synchronous>, transform_indices = @transform_4, window_bounds = array<i64: 32, 32>}, {pipeline_mode = #tpu.pipeline_mode<synchronous>, transform_indices = @transform_5, window_bounds = array<i64: 1, 32>}, {pipeline_mode = #tpu.pipeline_mode<synchronous>, transform_indices = @transform_6, window_bounds = array<i64: 32, 4>}, {pipeline_mode = #tpu.pipeline_mode<synchronous>, transform_indices = @transform_7, window_bounds = array<i64: 1, 4>}, {transform_indices = @transform_8, window_bounds = array<i64: 8, 4>}]} {
    %c0 = arith.constant 0 : index
    %c0_0 = arith.constant 0 : index
    %0 = vector.load %arg1[%c0, %c0_0] : memref<8x32xf32, #tpu.memory_space<vmem>>, vector<8x32xf32>
    %c0_1 = arith.constant 0 : index
    %c0_2 = arith.constant 0 : index
    %1 = vector.load %arg2[%c0_1, %c0_2] : memref<8x32xf32, #tpu.memory_space<vmem>>, vector<8x32xf32>
    %2 = arith.mulf %0, %1 : vector<8x32xf32>
    %c0_3 = arith.constant 0 : index
    %c0_4 = arith.constant 0 : index
    %3 = vector.load %arg3[%c0_3, %c0_4] : memref<32x32xf32, #tpu.memory_space<vmem>>, vector<32x32xf32>
    %cst = arith.constant dense<0.000000e+00> : vector<8x32xf32>
    %4 = tpu.matmul %2, %3, %cst {dimension_numbers = #tpu.dot_dimension_numbers<[1], [0], [0], [1], [0, 0, 1, 1], [], []>} : vector<8x32xf32>, vector<32x32xf32>, vector<8x32xf32> -> vector<8x32xf32>
    %c0_5 = arith.constant 0 : index
    %c0_6 = arith.constant 0 : index
    %5 = vector.load %arg4[%c0_5, %c0_6] : memref<1x32xf32, #tpu.memory_space<vmem>>, vector<1x32xf32>
    %6 = vector.broadcast %5 : vector<1x32xf32> to vector<8x32xf32>
    %7 = arith.addf %4, %6 : vector<8x32xf32>
    %cst_7 = arith.constant 0.000000e+00 : f32
    %8 = vector.broadcast %cst_7 : f32 to vector<8x32xf32>
    %9 = arith.maximumf %7, %8 : vector<8x32xf32>
    %c0_8 = arith.constant 0 : index
    %c0_9 = arith.constant 0 : index
    %10 = vector.load %arg5[%c0_8, %c0_9] : memref<32x32xf32, #tpu.memory_space<vmem>>, vector<32x32xf32>
    %cst_10 = arith.constant dense<0.000000e+00> : vector<8x32xf32>
    %11 = tpu.matmul %9, %10, %cst_10 {dimension_numbers = #tpu.dot_dimension_numbers<[1], [0], [0], [1], [0, 0, 1, 1], [], []>} : vector<8x32xf32>, vector<32x32xf32>, vector<8x32xf32> -> vector<8x32xf32>
    %c0_11 = arith.constant 0 : index
    %c0_12 = arith.constant 0 : index
    %12 = vector.load %arg6[%c0_11, %c0_12] : memref<1x32xf32, #tpu.memory_space<vmem>>, vector<1x32xf32>
    %13 = vector.broadcast %12 : vector<1x32xf32> to vector<8x32xf32>
    %14 = arith.addf %11, %13 : vector<8x32xf32>
    %cst_13 = arith.constant 0.000000e+00 : f32
    %15 = vector.broadcast %cst_13 : f32 to vector<8x32xf32>
    %16 = arith.maximumf %14, %15 : vector<8x32xf32>
    %c0_14 = arith.constant 0 : index
    %c0_15 = arith.constant 0 : index
    %17 = vector.load %arg7[%c0_14, %c0_15] : memref<32x4xf32, #tpu.memory_space<vmem>>, vector<32x4xf32>
    %cst_16 = arith.constant dense<0.000000e+00> : vector<8x4xf32>
    %18 = tpu.matmul %16, %17, %cst_16 {dimension_numbers = #tpu.dot_dimension_numbers<[1], [0], [0], [1], [0, 0, 1, 1], [], []>} : vector<8x32xf32>, vector<32x4xf32>, vector<8x4xf32> -> vector<8x4xf32>
    %c0_17 = arith.constant 0 : index
    %c0_18 = arith.constant 0 : index
    %19 = vector.load %arg8[%c0_17, %c0_18] : memref<1x4xf32, #tpu.memory_space<vmem>>, vector<1x4xf32>
    %20 = vector.broadcast %19 : vector<1x4xf32> to vector<8x4xf32>
    %21 = arith.addf %18, %20 : vector<8x4xf32>
    %c0_19 = arith.constant 0 : index
    %c0_20 = arith.constant 0 : index
    %22 = vector.load %arg9[%c0_19, %c0_20] : memref<8x4xf32, #tpu.memory_space<vmem>>, vector<8x4xf32>
    tpu.vector_store %arg9[%c0_19, %c0_20], %21 {strides = array<i32>} : memref<8x4xf32, #tpu.memory_space<vmem>>, vector<8x4xf32>,
    return
  }
  func.func @transform_0(%arg0: i32) -> (i32, i32) {
    %c0_i32 = arith.constant 0 : i32
    %c0_i32_0 = arith.constant 0 : i32
    return %arg0, %c0_i32 : i32, i32
  }
  func.func @transform_1(%arg0: i32) -> (i32, i32) {
    %c0_i32 = arith.constant 0 : i32
    %c0_i32_0 = arith.constant 0 : i32
    return %arg0, %c0_i32 : i32, i32
  }
  func.func @transform_2(%arg0: i32) -> (i32, i32) {
    %c0_i32 = arith.constant 0 : i32
    %c0_i32_0 = arith.constant 0 : i32
    %c0_i32_1 = arith.constant 0 : i32
    return %c0_i32, %c0_i32_0 : i32, i32
  }
  func.func @transform_3(%arg0: i32) -> (i32, i32) {
    %c0_i32 = arith.constant 0 : i32
    %c0_i32_0 = arith.constant 0 : i32
    %c0_i32_1 = arith.constant 0 : i32
    return %c0_i32, %c0_i32_0 : i32, i32
  }
  func.func @transform_4(%arg0: i32) -> (i32, i32) {
    %c0_i32 = arith.constant 0 : i32
    %c0_i32_0 = arith.constant 0 : i32
    %c0_i32_1 = arith.constant 0 : i32
    return %c0_i32, %c0_i32_0 : i32, i32
  }
  func.func @transform_5(%arg0: i32) -> (i32, i32) {
    %c0_i32 = arith.constant 0 : i32
    %c0_i32_0 = arith.constant 0 : i32
    %c0_i32_1 = arith.constant 0 : i32
    return %c0_i32, %c0_i32_0 : i32, i32
  }
  func.func @transform_6(%arg0: i32) -> (i32, i32) {
    %c0_i32 = arith.constant 0 : i32
    %c0_i32_0 = arith.constant 0 : i32
    %c0_i32_1 = arith.constant 0 : i32
    return %c0_i32, %c0_i32_0 : i32, i32
  }
  func.func @transform_7(%arg0: i32) -> (i32, i32) {
    %c0_i32 = arith.constant 0 : i32
    %c0_i32_0 = arith.constant 0 : i32
    %c0_i32_1 = arith.constant 0 : i32
    return %c0_i32, %c0_i32_0 : i32, i32
  }
  func.func @transform_8(%arg0: i32) -> (i32, i32) {
    %c0_i32 = arith.constant 0 : i32
    %c0_i32_0 = arith.constant 0 : i32
    return %arg0, %c0_i32 : i32, i32
  }
}

</mosaic_0001>

<llo_original>
// kernel: tpu_custom_call.1
$region0: #{tpu_custom_call.1}
  #allocation0 [shape = 'u32[]', space=smem, size = 0x4, offset = 0x4, fixed_abs, tag = 'smem constant byte address 0x4 - core index']
  #allocation1 [shape = 'u32[144,128]{1,0:T(1,128)}', space=vmem, size = 0x12000, scoped, tag = 'internal scratch']
  %s0 = inlined_call_operand.vmem [shape: f32[8,32], index: 0, kind: input, shape index: {}]
  %s1 = inlined_call_operand.hbm [shape: f32[8,32], index: 1, kind: input, shape index: {}]
  %s2 = inlined_call_operand.vmem [shape: f32[32,32], index: 2, kind: input, shape index: {}]
  %s3 = inlined_call_operand.vmem [shape: f32[1,32], index: 3, kind: input, shape index: {}]
  %s4 = inlined_call_operand.hbm [shape: f32[32,32], index: 4, kind: input, shape index: {}]
  %s5 = inlined_call_operand.vmem [shape: f32[1,32], index: 5, kind: input, shape index: {}]
  %s6 = inlined_call_operand.vmem [shape: f32[32,4], index: 6, kind: input, shape index: {}]
  %s7 = inlined_call_operand.vmem [shape: f32[1,4], index: 7, kind: input, shape index: {}]
  %s8 = inlined_call_operand.vmem [shape: f32[8,4], index: 8, kind: output, shape index: {}]
  %s9 = sld [smem:[#allocation0]]
  $region50: #{tpu_custom_call.1} parent=0
    _
  %s11 = ssub.s32 1, %s9
  %s12 = scalar_select 0, %s11, %s9
  $region1: #{tpu_custom_call.1} parent=0
    #allocation2 [shape = 'u8[4096]{0}', space=vmem, size = 0x1000, scoped, tag = 'input window, operand 1, single buffered']
    #allocation3 [shape = 's32[1]{0}', space=sflag, size = 0x4, scoped, tag = 'scoped memory for tpu_custom_call.1']
    #allocation4 [shape = 'u8[16384]{0}', space=vmem, size = 0x4000, scoped, tag = 'input window, operand 4, single buffered']
    #allocation5 [shape = 's32[1]{0}', space=sflag, size = 0x4, scoped, tag = 'scoped memory for tpu_custom_call.1']
    %13 = vsyncpa [#allocation3], 0
    %14 = vsyncpa [#allocation5], 0
    // Predicated region
    $region2: #{tpu_custom_call.1} parent=1 // pred_check
      _
    $region3: #{tpu_custom_call.1} parent=1 // pred_check_branch
      %16 = sbr.rel (0) target = $region5
    $region4: #{tpu_custom_call.1} parent=1 // pred_region
      _
    $region5: #{tpu_custom_call.1} parent=1 // pred_fallthru
      _
    // Predicated region
    $region6: #{tpu_custom_call.1} parent=1 // pred_check
      _
    $region7: #{tpu_custom_call.1} parent=1 // pred_check_branch
      %18 = sbr.rel (0) target = $region9
    $region8: #{tpu_custom_call.1} parent=1 // pred_region
      %s20 = ssub.s32 128, 128
      %21 = vsyncadd [#allocation3], %s20
      %s23 = sshll.u32 [#allocation2], 4
      %s24 = int_to_ptr.vmem [resolvable:$true] %s23
      %26 = dma.hbm_to_vmem [thread:$0]  %s1, 128, %s24, [#allocation3]
    $region9: #{tpu_custom_call.1} parent=1 // pred_fallthru
      _
    // Predicated region
    $region10: #{tpu_custom_call.1} parent=1 // pred_check
      _
    $region11: #{tpu_custom_call.1} parent=1 // pred_check_branch
      %28 = sbr.rel (0) target = $region13
    $region12: #{tpu_custom_call.1} parent=1 // pred_region
      _
    $region13: #{tpu_custom_call.1} parent=1 // pred_fallthru
      _
    // Predicated region
    $region14: #{tpu_custom_call.1} parent=1 // pred_check
      _
    $region15: #{tpu_custom_call.1} parent=1 // pred_check_branch
      %30 = sbr.rel (0) target = $region17
    $region16: #{tpu_custom_call.1} parent=1 // pred_region
      _
    $region17: #{tpu_custom_call.1} parent=1 // pred_fallthru
      _
    // Predicated region
    $region18: #{tpu_custom_call.1} parent=1 // pred_check
      _
    $region19: #{tpu_custom_call.1} parent=1 // pred_check_branch
      %32 = sbr.rel (0) target = $region21
    $region20: #{tpu_custom_call.1} parent=1 // pred_region
      %s34 = ssub.s32 512, 512
      %35 = vsyncadd [#allocation5], %s34
      %s36 = sshll.u32 [#allocation4], 4
      %s37 = int_to_ptr.vmem [resolvable:$true] %s36
      %42 = dma.hbm_to_vmem [thread:$0]  %s4, 512, %s37, [#allocation5], 128, 128, 8
    $region21: #{tpu_custom_call.1} parent=1 // pred_fallthru
      _
    // Predicated region
    $region22: #{tpu_custom_call.1} parent=1 // pred_check
      _
    $region23: #{tpu_custom_call.1} parent=1 // pred_check_branch
      %44 = sbr.rel (0) target = $region25
    $region24: #{tpu_custom_call.1} parent=1 // pred_region
      _
    $region25: #{tpu_custom_call.1} parent=1 // pred_fallthru
      _
    // Predicated region
    $region26: #{tpu_custom_call.1} parent=1 // pred_check
      _
    $region27: #{tpu_custom_call.1} parent=1 // pred_check_branch
      %46 = sbr.rel (0) target = $region29
    $region28: #{tpu_custom_call.1} parent=1 // pred_region
      _
    $region29: #{tpu_custom_call.1} parent=1 // pred_fallthru
      _
    // Predicated region
    $region30: #{tpu_custom_call.1} parent=1 // pred_check
      _
    $region31: #{tpu_custom_call.1} parent=1 // pred_check_branch
      %48 = sbr.rel (0) target = $region33
    $region32: #{tpu_custom_call.1} parent=1 // pred_region
      _
    $region33: #{tpu_custom_call.1} parent=1 // pred_fallthru
      _
    // Predicated region
    $region34: #{tpu_custom_call.1} parent=1 // pred_check
      _
    $region35: #{tpu_custom_call.1} parent=1 // pred_check_branch
      %50 = sbr.rel (0) target = $region37
    $region36: #{tpu_custom_call.1} parent=1 // pred_region
      %51 = dma.done [#allocation3], 128
    $region37: #{tpu_custom_call.1} parent=1 // pred_fallthru
      _
    // Predicated region
    $region38: #{tpu_custom_call.1} parent=1 // pred_check
      _
    $region39: #{tpu_custom_call.1} parent=1 // pred_check_branch
      %53 = sbr.rel (0) target = $region41
    $region40: #{tpu_custom_call.1} parent=1 // pred_region
      %54 = dma.done [#allocation5], 512
    $region41: #{tpu_custom_call.1} parent=1 // pred_fallthru
      _
    %v55 = vld [vmem:[%s0] sm:$0xff]
    %v56 = vld [vmem:[#allocation2] sm:$0xff]
    %v57 = vmul.f32 %v55, %v56
    %v58 = vld [vmem:[%s2] sm:$0xff]
    %v59 = vld [vmem:[%s2 + $0x8] sm:$0xff]
    %v60 = vld [vmem:[%s2 + $0x10] sm:$0xff]
    %v61 = vld [vmem:[%s2 + $0x18] sm:$0xff]
    %v62 = vld [vmem:[%s3] sm:$0x1]
    %v64 = vlaneseq
    %v65 = vshrl.u32 %v64, 7
    %v66 = vsub.s32 0, %v65
    %v67 = vrot.slane %v62, %v66
    %vm69 = vcmask 261120
    %v71 = vsel %vm69, %v57, 0
    %73 = vmatprep.subr.mxu0 0.0
    %74 = vmatpush1.msra.mxu0 %v58
    %75 = vmatprep.subr.mxu0 0.0
    %76 = vmatpush1.msra.mxu0 %v59
    %77 = vmatprep.subr.mxu0 0.0
    %78 = vmatpush1.msra.mxu0 %v60
    %79 = vmatprep.subr.mxu0 0.0
    %80 = vmatpush1.msra.mxu0 %v61
    %81 = vmatprep.subr.mxu0 0.0
    %82 = vmatpush1.msra.mxu0 0.0
    %83 = vmatprep.subr.mxu0 0.0
    %84 = vmatpush1.msra.mxu0 0.0
    %85 = vmatprep.subr.mxu0 0.0
    %86 = vmatpush1.msra.mxu0 0.0
    %87 = vmatprep.subr.mxu0 0.0
    %88 = vmatpush1.msra.mxu0 0.0
    %89 = vmatprep.subr.mxu0 0.0
    %90 = vmatpush1.msra.mxu0 0.0
    %91 = vmatprep.subr.mxu0 0.0
    %92 = vmatpush1.msra.mxu0 0.0
    %93 = vmatprep.subr.mxu0 0.0
    %94 = vmatpush1.msra.mxu0 0.0
    %95 = vmatprep.subr.mxu0 0.0
    %96 = vmatpush1.msra.mxu0 0.0
    %97 = vmatprep.subr.mxu0 0.0
    %98 = vmatpush1.msra.mxu0 0.0
    %99 = vmatprep.subr.mxu0 0.0
    %100 = vmatpush1.msra.mxu0 0.0
    %101 = vmatprep.subr.mxu0 0.0
    %102 = vmatpush1.msra.mxu0 0.0
    %103 = vmatprep.subr.mxu0 0.0
    %104 = vmatpush1.msra.mxu0 0.0
    %105 = vmatprep.subr.mxu0 0.0
    %106 = vmatpush1.msra.mxu0 0.0
    %107 = vmatprep.subr.mxu0 0.0
    %108 = vmatpush1.msra.mxu0 0.0
    %109 = vmatprep.subr.mxu0 0.0
    %110 = vmatpush1.msra.mxu0 0.0
    %111 = vmatprep.subr.mxu0 0.0
    %112 = vmatpush1.msra.mxu0 0.0
    %113 = vmatprep.subr.mxu0 0.0
    %114 = vmatpush1.msra.mxu0 0.0
    %115 = vmatprep.subr.mxu0 0.0
    %116 = vmatpush1.msra.mxu0 0.0
    %117 = vmatprep.subr.mxu0 0.0
    %118 = vmatpush1.msra.mxu0 0.0
    %119 = vmatprep.subr.mxu0 0.0
    %120 = vmatpush1.msra.mxu0 0.0
    %121 = vmatprep.subr.mxu0 0.0
    %122 = vmatpush1.msra.mxu0 0.0
    %123 = vmatprep.subr.mxu0 0.0
    %124 = vmatpush1.msra.mxu0 0.0
    %125 = vmatprep.subr.mxu0 0.0
    %126 = vmatpush1.msra.mxu0 0.0
    %127 = vmatprep.subr.mxu0 0.0
    %128 = vmatpush1.msra.mxu0 0.0
    %129 = vmatprep.subr.mxu0 0.0
    %130 = vmatpush1.msra.mxu0 0.0
    %131 = vmatprep.subr.mxu0 0.0
    %132 = vmatpush1.msra.mxu0 0.0
    %133 = vmatprep.subr.mxu0 0.0
    %134 = vmatpush1.msra.mxu0 0.0
    %135 = vmatprep.subr.mxu0 0.0
    %136 = vmatpush1.msra.mxu0 0.0
    %137 = vmatprep.mubr.f32.mxu0 0.0
    %138 = vmatmul.mubr.f32.gmra.mrb[0].mxu0 %v71
    %v139 = vpop.f32.mrb[0].mxu0
    %v140 = vadd.f32 %v67, %v139
    %v141 = vpop.f32.mrb[0].mxu0
    %142 = vdwg.mxu0
    %v143 = vmax.f32 %v140, 0.0
    %v144 = vld [vmem:[#allocation4] sm:$0xff]
    %v145 = vld [vmem:[#allocation4 + $0x8] sm:$0xff]
    %v146 = vld [vmem:[#allocation4 + $0x10] sm:$0xff]
    %v147 = vld [vmem:[#allocation4 + $0x18] sm:$0xff]
    %v148 = vld [vmem:[%s5] sm:$0x1]
    %v150 = vlaneseq
    %v151 = vshrl.u32 %v150, 7
    %v152 = vsub.s32 0, %v151
    %v153 = vrot.slane %v148, %v152
    %v156 = vsel %vm69, %v143, 0
    %158 = vmatprep.subr.mxu0 0.0
    %159 = vmatpush1.msra.mxu0 %v144
    %160 = vmatprep.subr.mxu0 0.0
    %161 = vmatpush1.msra.mxu0 %v145
    %162 = vmatprep.subr.mxu0 0.0
    %163 = vmatpush1.msra.mxu0 %v146
    %164 = vmatprep.subr.mxu0 0.0
    %165 = vmatpush1.msra.mxu0 %v147
    %166 = vmatprep.subr.mxu0 0.0
    %167 = vmatpush1.msra.mxu0 0.0
    %168 = vmatprep.subr.mxu0 0.0
    %169 = vmatpush1.msra.mxu0 0.0
    %170 = vmatprep.subr.mxu0 0.0
    %171 = vmatpush1.msra.mxu0 0.0
    %172 = vmatprep.subr.mxu0 0.0
    %173 = vmatpush1.msra.mxu0 0.0
    %174 = vmatprep.subr.mxu0 0.0
    %175 = vmatpush1.msra.mxu0 0.0
    %176 = vmatprep.subr.mxu0 0.0
    %177 = vmatpush1.msra.mxu0 0.0
    %178 = vmatprep.subr.mxu0 0.0
    %179 = vmatpush1.msra.mxu0 0.0
    %180 = vmatprep.subr.mxu0 0.0
    %181 = vmatpush1.msra.mxu0 0.0
    %182 = vmatprep.subr.mxu0 0.0
    %183 = vmatpush1.msra.mxu0 0.0
    %184 = vmatprep.subr.mxu0 0.0
    %185 = vmatpush1.msra.mxu0 0.0
    %186 = vmatprep.subr.mxu0 0.0
    %187 = vmatpush1.msra.mxu0 0.0
    %188 = vmatprep.subr.mxu0 0.0
    %189 = vmatpush1.msra.mxu0 0.0
    %190 = vmatprep.subr.mxu0 0.0
    %191 = vmatpush1.msra.mxu0 0.0
    %192 = vmatprep.subr.mxu0 0.0
    %193 = vmatpush1.msra.mxu0 0.0
    %194 = vmatprep.subr.mxu0 0.0
    %195 = vmatpush1.msra.mxu0 0.0
    %196 = vmatprep.subr.mxu0 0.0
    %197 = vmatpush1.msra.mxu0 0.0
    %198 = vmatprep.subr.mxu0 0.0
    %199 = vmatpush1.msra.mxu0 0.0
    %200 = vmatprep.subr.mxu0 0.0
    %201 = vmatpush1.msra.mxu0 0.0
    %202 = vmatprep.subr.mxu0 0.0
    %203 = vmatpush1.msra.mxu0 0.0
    %204 = vmatprep.subr.mxu0 0.0
    %205 = vmatpush1.msra.mxu0 0.0
    %206 = vmatprep.subr.mxu0 0.0
    %207 = vmatpush1.msra.mxu0 0.0
    %208 = vmatprep.subr.mxu0 0.0
    %209 = vmatpush1.msra.mxu0 0.0
    %210 = vmatprep.subr.mxu0 0.0
    %211 = vmatpush1.msra.mxu0 0.0
    %212 = vmatprep.subr.mxu0 0.0
    %213 = vmatpush1.msra.mxu0 0.0
    %214 = vmatprep.subr.mxu0 0.0
    %215 = vmatpush1.msra.mxu0 0.0
    %216 = vmatprep.subr.mxu0 0.0
    %217 = vmatpush1.msra.mxu0 0.0
    %218 = vmatprep.subr.mxu0 0.0
    %219 = vmatpush1.msra.mxu0 0.0
    %220 = vmatprep.subr.mxu0 0.0
    %221 = vmatpush1.msra.mxu0 0.0
    %222 = vmatprep.mubr.f32.mxu0 0.0
    %223 = vmatmul.mubr.f32.gmra.mrb[0].mxu0 %v156
    %v224 = vpop.f32.mrb[0].mxu0
    %v225 = vadd.f32 %v153, %v224
    %v226 = vpop.f32.mrb[0].mxu0
    %227 = vdwg.mxu0
    %v228 = vmax.f32 %v225, 0.0
    %v229 = vld [vmem:[%s6] sm:$0xff]
    %v230 = vld [vmem:[%s6 + $0x8] sm:$0xff]
    %v231 = vld [vmem:[%s6 + $0x10] sm:$0xff]
    %v232 = vld [vmem:[%s6 + $0x18] sm:$0xff]
    %v233 = vld [vmem:[%s7] sm:$0x1]
    %v235 = vlaneseq
    %v236 = vshrl.u32 %v235, 7
    %v237 = vsub.s32 0, %v236
    %v238 = vrot.slane %v233, %v237
    %v241 = vsel %vm69, %v228, 0
    %243 = vmatprep.subr.mxu0 0.0
    %244 = vmatpush1.msra.mxu0 %v229
    %245 = vmatprep.subr.mxu0 0.0
    %246 = vmatpush1.msra.mxu0 %v230
    %247 = vmatprep.subr.mxu0 0.0
    %248 = vmatpush1.msra.mxu0 %v231
    %249 = vmatprep.subr.mxu0 0.0
    %250 = vmatpush1.msra.mxu0 %v232
    %251 = vmatprep.subr.mxu0 0.0
    %252 = vmatpush1.msra.mxu0 0.0
    %253 = vmatprep.subr.mxu0 0.0
    %254 = vmatpush1.msra.mxu0 0.0
    %255 = vmatprep.subr.mxu0 0.0
    %256 = vmatpush1.msra.mxu0 0.0
    %257 = vmatprep.subr.mxu0 0.0
    %258 = vmatpush1.msra.mxu0 0.0
    %259 = vmatprep.subr.mxu0 0.0
    %260 = vmatpush1.msra.mxu0 0.0
    %261 = vmatprep.subr.mxu0 0.0
    %262 = vmatpush1.msra.mxu0 0.0
    %263 = vmatprep.subr.mxu0 0.0
    %264 = vmatpush1.msra.mxu0 0.0
    %265 = vmatprep.subr.mxu0 0.0
    %266 = vmatpush1.msra.mxu0 0.0
    %267 = vmatprep.subr.mxu0 0.0
    %268 = vmatpush1.msra.mxu0 0.0
    %269 = vmatprep.subr.mxu0 0.0
    %270 = vmatpush1.msra.mxu0 0.0
    %271 = vmatprep.subr.mxu0 0.0
    %272 = vmatpush1.msra.mxu0 0.0
    %273 = vmatprep.subr.mxu0 0.0
    %274 = vmatpush1.msra.mxu0 0.0
    %275 = vmatprep.subr.mxu0 0.0
    %276 = vmatpush1.msra.mxu0 0.0
    %277 = vmatprep.subr.mxu0 0.0
    %278 = vmatpush1.msra.mxu0 0.0
    %279 = vmatprep.subr.mxu0 0.0
    %280 = vmatpush1.msra.mxu0 0.0
    %281 = vmatprep.subr.mxu0 0.0
    %282 = vmatpush1.msra.mxu0 0.0
    %283 = vmatprep.subr.mxu0 0.0
    %284 = vmatpush1.msra.mxu0 0.0
    %285 = vmatprep.subr.mxu0 0.0
    %286 = vmatpush1.msra.mxu0 0.0
    %287 = vmatprep.subr.mxu0 0.0
    %288 = vmatpush1.msra.mxu0 0.0
    %289 = vmatprep.subr.mxu0 0.0
    %290 = vmatpush1.msra.mxu0 0.0
    %291 = vmatprep.subr.mxu0 0.0
    %292 = vmatpush1.msra.mxu0 0.0
    %293 = vmatprep.subr.mxu0 0.0
    %294 = vmatpush1.msra.mxu0 0.0
    %295 = vmatprep.subr.mxu0 0.0
    %296 = vmatpush1.msra.mxu0 0.0
    %297 = vmatprep.subr.mxu0 0.0
    %298 = vmatpush1.msra.mxu0 0.0
    %299 = vmatprep.subr.mxu0 0.0
    %300 = vmatpush1.msra.mxu0 0.0
    %301 = vmatprep.subr.mxu0 0.0
    %302 = vmatpush1.msra.mxu0 0.0
    %303 = vmatprep.subr.mxu0 0.0
    %304 = vmatpush1.msra.mxu0 0.0
    %305 = vmatprep.subr.mxu0 0.0
    %306 = vmatpush1.msra.mxu0 0.0
    %307 = vmatprep.mubr.f32.mxu0 0.0
    %308 = vmatmul.mubr.f32.gmra.mrb[0].mxu0 %v241
    %v309 = vpop.f32.mrb[0].mxu0
    %v310 = vadd.f32 %v238, %v309
    %v311 = vpop.f32.mrb[0].mxu0
    %312 = vdwg.mxu0
    %vm313 = vcmask 31744
    %314 = vst.msk [vmem:[%s8] sm:$0xff] %vm313, %v310
    // Predicated region
    $region42: #{tpu_custom_call.1} parent=1 // pred_check
      _
    $region43: #{tpu_custom_call.1} parent=1 // pred_check_branch
      %316 = sbr.rel (0) target = $region45
    $region44: #{tpu_custom_call.1} parent=1 // pred_region
      _
    $region45: #{tpu_custom_call.1} parent=1 // pred_fallthru
      _
    // Predicated region
    $region46: #{tpu_custom_call.1} parent=1 // pred_check
      _
    $region47: #{tpu_custom_call.1} parent=1 // pred_check_branch
      %318 = sbr.rel (0) target = $region49
    $region48: #{tpu_custom_call.1} parent=1 // pred_region
      _
    $region49: #{tpu_custom_call.1} parent=1 // pred_fallthru
      _
    %319 = vsyncpa [#allocation3], 1
    %320 = vsyncpa [#allocation5], 1

</llo_original>
